<compile_context>
chip_gen: v6e
topology: v6e:2x2x1
jax: 0.10.0
libtpu: 0.0.40
codegen_flags: <defaults>
</compile_context>

<pallas_src>
import numpy as np
import jax
import jax.numpy as jnp
from jax.experimental import pallas as pl
from jax.experimental.pallas import tpu as pltpu

LOG2 = float(np.log(2.0))


def _round_up(x, m):
    return ((x + m - 1) // m) * m


def _edge_mlp_kernel(g_ref, e_ref, w1g_ref, w1e_ref, b1_ref, w2_ref, b2_ref,
                     out_ref):
    # g_ref  : (T, F*2*node_size)  bf16   gathered endpoint features (folded)
    # e_ref  : (T, F*edge_size)    bf16   edge features (folded)
    # w1g    : (F*2*node_size, F*H) bf16  block-diagonal first-layer (node rows)
    # w1e    : (F*edge_size,   F*H) bf16  block-diagonal first-layer (edge rows)
    # b1     : (1, F*H)   f32
    # w2     : (F*H, F*D_out) bf16 block-diagonal second layer
    # b2     : (1, F*D_out) f32
    # out    : (T, F*D_out)
    h = jnp.dot(g_ref[...], w1g_ref[...], preferred_element_type=jnp.float32)
    h = h + jnp.dot(e_ref[...], w1e_ref[...], preferred_element_type=jnp.float32)
    h = h + b1_ref[...]
    # shifted softplus in f32, numerically stable: max(x,0)+log(1+exp(-|x|))-ln2
    h = jnp.maximum(h, 0.0) + jnp.log(1.0 + jnp.exp(-jnp.abs(h))) - LOG2
    y = jnp.dot(h.astype(w2_ref.dtype), w2_ref[...],
                preferred_element_type=jnp.float32)
    y = y + b2_ref[...]
    out_ref[...] = y.astype(out_ref.dtype)


def edge_update_pallas(edge_state, edges, node_state, params, *,
                       tile_e=2048, compute_dtype=jnp.bfloat16):
    """Pallas implementation of EdgeUpdate.forward (row-wise fused MLP)."""
    w1, b1, w2, b2 = params      # w1:(2*node+edge, H)  b1:(H,)  w2:(H, D_out)  b2:(D_out,)
    E, edge_size = edge_state.shape
    node_size = node_state.shape[1]
    H = w1.shape[1]
    D_out = w2.shape[1]
    out_dtype = edge_state.dtype

    # ---- fold factor: pack F consecutive edge rows along the lane axis so the
    # output block is >=128 lanes wide (dense vst) and inputs are lane-dense.
    F = min(16, max(1, 128 // max(D_out, 1))) if D_out < 128 else 1
    E_pad = _round_up(max(E, 1), F)
    E_fold = E_pad // F

    gw = F * 2 * node_size      # folded gathered-node width
    ew = F * edge_size          # folded edge-feature width
    hw = F * H                  # folded hidden width
    ow = F * D_out              # folded output width

    # ---- glue (plain XLA): one fused endpoint gather on bf16 node features,
    # then FREE row-major reshapes into the folded layout.  No HBM concat.
    edges_p = jnp.pad(edges.astype(jnp.int32), ((0, E_pad - E), (0, 0)))
    node_c = node_state.astype(compute_dtype)
    g_f = jnp.take(node_c, edges_p.reshape(-1), axis=0).reshape(E_fold, gw)
    e_f = jnp.pad(edge_state, ((0, E_pad - E), (0, 0))).astype(compute_dtype)
    e_f = e_f.reshape(E_fold, ew)

    # ---- weights: split w1 by input block (replaces the concat) and expand to
    # F-fold block-diagonal form so the packed lane groups stay independent.
    eyeF = jnp.eye(F, dtype=w1.dtype)
    w1g = jnp.kron(eyeF, w1[:2 * node_size]).astype(compute_dtype)   # (gw, hw)
    w1e = jnp.kron(eyeF, w1[2 * node_size:]).astype(compute_dtype)   # (ew, hw)
    w2b = jnp.kron(eyeF, w2).astype(compute_dtype)                   # (hw, ow)
    b1b = jnp.tile(b1.astype(jnp.float32), F).reshape(1, hw)
    b2b = jnp.tile(b2.astype(jnp.float32), F).reshape(1, ow)

    # ---- chip-derated VMEM budget ------------------------------------------
    try:
        cap = int(getattr(pltpu.get_tpu_info(), "vmem_capacity_bytes", 64 << 20))
    except Exception:
        cap = 64 << 20
    vmem_budget = int(min(48 << 20, cap // 2))

    # ---- tile sizing (in folded rows) ---------------------------------------
    SUB = 32                                    # bf16-safe sublane granularity
    itemsize = jnp.dtype(compute_dtype).itemsize
    weight_bytes = 2 * itemsize * (w1g.size + w1e.size + w2b.size) \
        + 2 * 4 * (hw + ow)                     # default double-buffered residents
    row_bytes = itemsize * (gw + ew) + 4 * ow   # per folded row, per buffer
    avail = max(vmem_budget - weight_bytes - (2 << 20), 2 * SUB * 2 * row_bytes)
    max_tile = max(SUB, (avail // (2 * row_bytes)) // SUB * SUB)

    want = max(SUB, _round_up(max(tile_e // F, 1), SUB))
    # v7x has 2 TensorCores: keep >=2 grid steps when there is enough work.
    want = min(want, max(SUB, _round_up(-(-E_fold // 2), SUB)))
    want = min(want, max_tile)
    tile_f = E_fold if E_fold <= want else want
    grid = (pl.cdiv(E_fold, tile_f),)

    cost = pl.CostEstimate(
        flops=2 * E * ((2 * node_size + edge_size) * H + H * D_out),
        transcendentals=E * H,
        bytes_accessed=int(
            itemsize * (g_f.size + e_f.size + w1g.size + w1e.size + w2b.size)
            + 4 * (b1b.size + b2b.size)
            + jnp.dtype(out_dtype).itemsize * E_fold * ow),
    )

    out_f = pl.pallas_call(
        _edge_mlp_kernel,
        out_shape=jax.ShapeDtypeStruct((E_fold, ow), out_dtype),
        grid=grid,
        in_specs=[
            pl.BlockSpec((tile_f, gw), lambda i: (i, 0)),    # gathered nodes
            pl.BlockSpec((tile_f, ew), lambda i: (i, 0)),    # edge features
            pl.BlockSpec((gw, hw), lambda i: (0, 0)),        # w1 node rows (resident)
            pl.BlockSpec((ew, hw), lambda i: (0, 0)),        # w1 edge rows (resident)
            pl.BlockSpec((1, hw), lambda i: (0, 0)),         # b1
            pl.BlockSpec((hw, ow), lambda i: (0, 0)),        # w2 (resident)
            pl.BlockSpec((1, ow), lambda i: (0, 0)),         # b2
        ],
        out_specs=pl.BlockSpec((tile_f, ow), lambda i: (i, 0)),
        compiler_params=pltpu.CompilerParams(
            dimension_semantics=("parallel",),
            vmem_limit_bytes=vmem_budget,
        ),
        cost_estimate=cost,
    )(g_f, e_f, w1g, w1e, b1b, w2b, b2b)

    # Free row-major un-fold back to (E_pad, D_out), drop padded rows.
    return out_f.reshape(E_pad, D_out)[:E]


def init_params(key, edge_size, node_size, dtype=jnp.float32):
    """Deterministic parameter init matching nn.Linear shapes.
    PyTorch Linear stores weight as (out, in); we keep the math-equivalent
    (in, out) layout so the kernel computes x @ W + b."""
    d_in = 2 * node_size + edge_size
    hidden = 2 * edge_size
    k1, k2, k3, k4 = jax.random.split(key, 4)
    s1 = 1.0 / np.sqrt(d_in)
    s2 = 1.0 / np.sqrt(hidden)
    w1 = jax.random.uniform(k1, (d_in, hidden), dtype, -s1, s1)
    b1 = jax.random.uniform(k2, (hidden,), dtype, -s1, s1)
    w2 = jax.random.uniform(k3, (hidden, edge_size), dtype, -s2, s2)
    b2 = jax.random.uniform(k4, (edge_size,), dtype, -s2, s2)
    return w1, b1, w2, b2


def edge_update_reference(edge_state, edges, node_state, params):
    w1, b1, w2, b2 = params
    E = edge_state.shape[0]
    node_size = node_state.shape[1]
    combined = jnp.concatenate(
        [node_state[edges].reshape(E, 2 * node_size), edge_state], axis=1
    )
    h = combined @ w1 + b1
    h = jax.nn.softplus(h) - LOG2
    return h @ w2 + b2


if __name__ == "__main__":
    node_size = 32
    edge_size = 32
    num_nodes = 8
    num_edges = 16

    key = jax.random.PRNGKey(0)
    k_edge, k_node, k_idx, k_par = jax.random.split(key, 4)

    edge_state = jax.random.normal(k_edge, (num_edges, edge_size), jnp.float32)
    node_state = jax.random.normal(k_node, (num_nodes, node_size), jnp.float32)
    edges = jax.random.randint(k_idx, (num_edges, 2), 0, num_nodes, jnp.int32)
    params = init_params(k_par, edge_size, node_size)

    out = edge_update_pallas(edge_state, edges, node_state, params)
    out = jax.block_until_ready(out)

    ref = edge_update_reference(edge_state, edges, node_state, params)
    assert out.shape == (num_edges, edge_size)
    # bf16 MXU operands -> compare against the exact f32 reference with a
    # tolerance that covers bf16 rounding.
    np.testing.assert_allclose(np.asarray(out), np.asarray(ref),
                               rtol=3e-2, atol=3e-2)

    print("KERNEL_OK")
</pallas_src>

<mosaic_0001>
module attributes {stable_mosaic.version = 11 : i64} {
  func.func @_edge_mlp_kernel(%arg0: i32, %arg1: memref<4x256xbf16, #tpu.memory_space<vmem>>, %arg2: memref<4x128xbf16, #tpu.memory_space<vmem>>, %arg3: memref<256x256xbf16, #tpu.memory_space<vmem>>, %arg4: memref<128x256xbf16, #tpu.memory_space<vmem>>, %arg5: memref<1x256xf32, #tpu.memory_space<vmem>>, %arg6: memref<256x128xbf16, #tpu.memory_space<vmem>>, %arg7: memref<1x128xf32, #tpu.memory_space<vmem>>, %arg8: memref<4x128xf32, #tpu.memory_space<vmem>>) attributes {dimension_semantics = [#tpu.dimension_semantics<parallel>], iteration_bounds = array<i64: 1>, scalar_prefetch = 0 : i64, scratch_operands = 0 : i64, tpu.core_type = #tpu.core_type<tc>, window_params = [{transform_indices = @transform_0, window_bounds = array<i64: 4, 256>}, {transform_indices = @transform_1, window_bounds = array<i64: 4, 128>}, {pipeline_mode = #tpu.pipeline_mode<synchronous>, transform_indices = @transform_2, window_bounds = array<i64: 256, 256>}, {pipeline_mode = #tpu.pipeline_mode<synchronous>, transform_indices = @transform_3, window_bounds = array<i64: 128, 256>}, {pipeline_mode = #tpu.pipeline_mode<synchronous>, transform_indices = @transform_4, window_bounds = array<i64: 1, 256>}, {pipeline_mode = #tpu.pipeline_mode<synchronous>, transform_indices = @transform_5, window_bounds = array<i64: 256, 128>}, {pipeline_mode = #tpu.pipeline_mode<synchronous>, transform_indices = @transform_6, window_bounds = array<i64: 1, 128>}, {transform_indices = @transform_7, window_bounds = array<i64: 4, 128>}]} {
    %c0 = arith.constant 0 : index
    %c0_0 = arith.constant 0 : index
    %0 = vector.load %arg1[%c0, %c0_0] : memref<4x256xbf16, #tpu.memory_space<vmem>>, vector<4x256xbf16>
    %c0_1 = arith.constant 0 : index
    %c0_2 = arith.constant 0 : index
    %1 = vector.load %arg3[%c0_1, %c0_2] : memref<256x256xbf16, #tpu.memory_space<vmem>>, vector<256x256xbf16>
    %cst = arith.constant dense<0.000000e+00> : vector<4x256xf32>
    %2 = tpu.matmul %0, %1, %cst {dimension_numbers = #tpu.dot_dimension_numbers<[1], [0], [0], [1], [0, 0, 1, 1], [], []>} : vector<4x256xbf16>, vector<256x256xbf16>, vector<4x256xf32> -> vector<4x256xf32>
    %c0_3 = arith.constant 0 : index
    %c0_4 = arith.constant 0 : index
    %3 = vector.load %arg2[%c0_3, %c0_4] : memref<4x128xbf16, #tpu.memory_space<vmem>>, vector<4x128xbf16>
    %c0_5 = arith.constant 0 : index
    %c0_6 = arith.constant 0 : index
    %4 = vector.load %arg4[%c0_5, %c0_6] : memref<128x256xbf16, #tpu.memory_space<vmem>>, vector<128x256xbf16>
    %cst_7 = arith.constant dense<0.000000e+00> : vector<4x256xf32>
    %5 = tpu.matmul %3, %4, %cst_7 {dimension_numbers = #tpu.dot_dimension_numbers<[1], [0], [0], [1], [0, 0, 1, 1], [], []>} : vector<4x128xbf16>, vector<128x256xbf16>, vector<4x256xf32> -> vector<4x256xf32>
    %6 = arith.addf %2, %5 : vector<4x256xf32>
    %c0_8 = arith.constant 0 : index
    %c0_9 = arith.constant 0 : index
    %7 = vector.load %arg5[%c0_8, %c0_9] : memref<1x256xf32, #tpu.memory_space<vmem>>, vector<1x256xf32>
    %8 = vector.broadcast %7 : vector<1x256xf32> to vector<4x256xf32>
    %9 = arith.addf %6, %8 : vector<4x256xf32>
    %cst_10 = arith.constant 0.000000e+00 : f32
    %10 = vector.broadcast %cst_10 : f32 to vector<4x256xf32>
    %11 = arith.maximumf %9, %10 : vector<4x256xf32>
    %12 = math.absf %9 : vector<4x256xf32>
    %cst_11 = arith.constant 0.000000e+00 : f32
    %13 = vector.broadcast %cst_11 : f32 to vector<4x256xf32>
    %14 = arith.subf %13, %12 : vector<4x256xf32>
    %15 = math.exp %14 : vector<4x256xf32>
    %cst_12 = arith.constant 1.000000e+00 : f32
    %16 = vector.broadcast %cst_12 : f32 to vector<4x256xf32>
    %17 = arith.addf %16, %15 : vector<4x256xf32>
    %18 = math.log %17 : vector<4x256xf32>
    %19 = arith.addf %11, %18 : vector<4x256xf32>
    %cst_13 = arith.constant 0.693147182 : f32
    %20 = vector.broadcast %cst_13 : f32 to vector<4x256xf32>
    %21 = arith.subf %19, %20 : vector<4x256xf32>
    %22 = arith.truncf %21 : vector<4x256xf32> to vector<4x256xbf16>
    %c0_14 = arith.constant 0 : index
    %c0_15 = arith.constant 0 : index
    %23 = vector.load %arg6[%c0_14, %c0_15] : memref<256x128xbf16, #tpu.memory_space<vmem>>, vector<256x128xbf16>
    %cst_16 = arith.constant dense<0.000000e+00> : vector<4x128xf32>
    %24 = tpu.matmul %22, %23, %cst_16 {dimension_numbers = #tpu.dot_dimension_numbers<[1], [0], [0], [1], [0, 0, 1, 1], [], []>} : vector<4x256xbf16>, vector<256x128xbf16>, vector<4x128xf32> -> vector<4x128xf32>
    %c0_17 = arith.constant 0 : index
    %c0_18 = arith.constant 0 : index
    %25 = vector.load %arg7[%c0_17, %c0_18] : memref<1x128xf32, #tpu.memory_space<vmem>>, vector<1x128xf32>
    %26 = vector.broadcast %25 : vector<1x128xf32> to vector<4x128xf32>
    %27 = arith.addf %24, %26 : vector<4x128xf32>
    %c0_19 = arith.constant 0 : index
    %c0_20 = arith.constant 0 : index
    %28 = vector.load %arg8[%c0_19, %c0_20] : memref<4x128xf32, #tpu.memory_space<vmem>>, vector<4x128xf32>
    tpu.vector_store %arg8[%c0_19, %c0_20], %27 {strides = array<i32>} : memref<4x128xf32, #tpu.memory_space<vmem>>, vector<4x128xf32>,
    return
  }
  func.func @transform_0(%arg0: i32) -> (i32, i32) {
    %c0_i32 = arith.constant 0 : i32
    %c0_i32_0 = arith.constant 0 : i32
    return %arg0, %c0_i32 : i32, i32
  }
  func.func @transform_1(%arg0: i32) -> (i32, i32) {
    %c0_i32 = arith.constant 0 : i32
    %c0_i32_0 = arith.constant 0 : i32
    return %arg0, %c0_i32 : i32, i32
  }
  func.func @transform_2(%arg0: i32) -> (i32, i32) {
    %c0_i32 = arith.constant 0 : i32
    %c0_i32_0 = arith.constant 0 : i32
    %c0_i32_1 = arith.constant 0 : i32
    return %c0_i32, %c0_i32_0 : i32, i32
  }
  func.func @transform_3(%arg0: i32) -> (i32, i32) {
    %c0_i32 = arith.constant 0 : i32
    %c0_i32_0 = arith.constant 0 : i32
    %c0_i32_1 = arith.constant 0 : i32
    return %c0_i32, %c0_i32_0 : i32, i32
  }
  func.func @transform_4(%arg0: i32) -> (i32, i32) {
    %c0_i32 = arith.constant 0 : i32
    %c0_i32_0 = arith.constant 0 : i32
    %c0_i32_1 = arith.constant 0 : i32
    return %c0_i32, %c0_i32_0 : i32, i32
  }
  func.func @transform_5(%arg0: i32) -> (i32, i32) {
    %c0_i32 = arith.constant 0 : i32
    %c0_i32_0 = arith.constant 0 : i32
    %c0_i32_1 = arith.constant 0 : i32
    return %c0_i32, %c0_i32_0 : i32, i32
  }
  func.func @transform_6(%arg0: i32) -> (i32, i32) {
    %c0_i32 = arith.constant 0 : i32
    %c0_i32_0 = arith.constant 0 : i32
    %c0_i32_1 = arith.constant 0 : i32
    return %c0_i32, %c0_i32_0 : i32, i32
  }
  func.func @transform_7(%arg0: i32) -> (i32, i32) {
    %c0_i32 = arith.constant 0 : i32
    %c0_i32_0 = arith.constant 0 : i32
    return %arg0, %c0_i32 : i32, i32
  }
}

</mosaic_0001>

<llo_original>
// kernel: tpu_custom_call.1
$region0: #{tpu_custom_call.1}
  #allocation0 [shape = 'u32[]', space=smem, size = 0x4, offset = 0x4, fixed_abs, tag = 'smem constant byte address 0x4 - core index']
  #allocation1 [shape = 'u32[144,128]{1,0:T(1,128)}', space=vmem, size = 0x12000, scoped, tag = 'internal scratch']
  %s0 = inlined_call_operand.hbm [shape: bf16[4,256], index: 0, kind: input, shape index: {}]
  %s1 = inlined_call_operand.hbm [shape: bf16[4,128], index: 1, kind: input, shape index: {}]
  %s2 = inlined_call_operand.hbm [shape: bf16[256,256], index: 2, kind: input, shape index: {}]
  %s3 = inlined_call_operand.hbm [shape: bf16[128,256], index: 3, kind: input, shape index: {}]
  %s4 = inlined_call_operand.vmem [shape: f32[1,256], index: 4, kind: input, shape index: {}]
  %s5 = inlined_call_operand.hbm [shape: bf16[256,128], index: 5, kind: input, shape index: {}]
  %s6 = inlined_call_operand.vmem [shape: f32[1,128], index: 6, kind: input, shape index: {}]
  %s7 = inlined_call_operand.hbm [shape: f32[4,128], index: 7, kind: output, shape index: {}]
  %s8 = sld [smem:[#allocation0]]
  $region58: #{tpu_custom_call.1} parent=0
    _
  %s10 = ssub.s32 1, %s8
  %s11 = scalar_select 0, %s10, %s8
  $region1: #{tpu_custom_call.1} parent=0
    #allocation2 [shape = 'u8[2048]{0}', space=vmem, size = 0x800, scoped, tag = 'input window, operand 0, single buffered']
    #allocation3 [shape = 's32[1]{0}', space=sflag, size = 0x4, scoped, tag = 'scoped memory for tpu_custom_call.1']
    #allocation4 [shape = 's32[1]{0}', space=sflag, size = 0x4, scoped, tag = 'scoped memory for tpu_custom_call.1']
    #allocation5 [shape = 'u8[1024]{0}', space=vmem, size = 0x400, scoped, tag = 'input window, operand 1, single buffered']
    #allocation6 [shape = 's32[1]{0}', space=sflag, size = 0x4, scoped, tag = 'scoped memory for tpu_custom_call.1']
    #allocation7 [shape = 'u8[131072]{0}', space=vmem, size = 0x20000, scoped, tag = 'input window, operand 2, single buffered']
    #allocation8 [shape = 'u8[65536]{0}', space=vmem, size = 0x10000, scoped, tag = 'input window, operand 3, single buffered']
    #allocation9 [shape = 's32[1]{0}', space=sflag, size = 0x4, scoped, tag = 'scoped memory for tpu_custom_call.1']
    #allocation10 [shape = 'u8[65536]{0}', space=vmem, size = 0x10000, scoped, tag = 'input window, operand 5, single buffered']
    #allocation11 [shape = 'u8[2048]{0}', space=vmem, size = 0x800, scoped, tag = 'output window, operand 0, single buffered']
    %12 = vsyncpa [#allocation3], 0
    %13 = vsyncpa [#allocation6], 0
    %14 = vsyncpa [#allocation9], 0
    %15 = vsyncpa [#allocation4], 0
    // Predicated region
    $region2: #{tpu_custom_call.1} parent=1 // pred_check
      _
    $region3: #{tpu_custom_call.1} parent=1 // pred_check_branch
      %17 = sbr.rel (0) target = $region5
    $region4: #{tpu_custom_call.1} parent=1 // pred_region
      %s19 = ssub.s32 64, 64
      %20 = vsyncadd [#allocation3], %s19
      %s22 = sshll.u32 [#allocation2], 4
      %s23 = int_to_ptr.vmem [resolvable:$true] %s22
      %25 = dma.hbm_to_vmem [thread:$0]  %s0, 64, %s23, [#allocation3]
    $region5: #{tpu_custom_call.1} parent=1 // pred_fallthru
      _
    // Predicated region
    $region6: #{tpu_custom_call.1} parent=1 // pred_check
      _
    $region7: #{tpu_custom_call.1} parent=1 // pred_check_branch
      %27 = sbr.rel (0) target = $region9
    $region8: #{tpu_custom_call.1} parent=1 // pred_region
      %s29 = ssub.s32 32, 32
      %30 = vsyncadd [#allocation6], %s29
      %s32 = sshll.u32 [#allocation5], 4
      %s33 = int_to_ptr.vmem [resolvable:$true] %s32
      %35 = dma.hbm_to_vmem [thread:$0]  %s1, 32, %s33, [#allocation6]
    $region9: #{tpu_custom_call.1} parent=1 // pred_fallthru
      _
    // Predicated region
    $region10: #{tpu_custom_call.1} parent=1 // pred_check
      _
    $region11: #{tpu_custom_call.1} parent=1 // pred_check_branch
      %37 = sbr.rel (0) target = $region13
    $region12: #{tpu_custom_call.1} parent=1 // pred_region
      %s39 = ssub.s32 4096, 4096
      %40 = vsyncadd [#allocation6], %s39
      %s41 = sshll.u32 [#allocation7], 4
      %s42 = int_to_ptr.vmem [resolvable:$true] %s41
      %47 = dma.hbm_to_vmem [thread:$0]  %s2, 4096, %s42, [#allocation6], 128, 128, 8
    $region13: #{tpu_custom_call.1} parent=1 // pred_fallthru
      _
    // Predicated region
    $region14: #{tpu_custom_call.1} parent=1 // pred_check
      _
    $region15: #{tpu_custom_call.1} parent=1 // pred_check_branch
      %49 = sbr.rel (0) target = $region17
    $region16: #{tpu_custom_call.1} parent=1 // pred_region
      %s51 = ssub.s32 2048, 2048
      %52 = vsyncadd [#allocation9], %s51
      %s53 = sshll.u32 [#allocation8], 4
      %s54 = int_to_ptr.vmem [resolvable:$true] %s53
      %59 = dma.hbm_to_vmem [thread:$0]  %s3, 2048, %s54, [#allocation9], 128, 128, 8
    $region17: #{tpu_custom_call.1} parent=1 // pred_fallthru
      _
    // Predicated region
    $region18: #{tpu_custom_call.1} parent=1 // pred_check
      _
    $region19: #{tpu_custom_call.1} parent=1 // pred_check_branch
      %61 = sbr.rel (0) target = $region21
    $region20: #{tpu_custom_call.1} parent=1 // pred_region
      _
    $region21: #{tpu_custom_call.1} parent=1 // pred_fallthru
      _
    // Predicated region
    $region22: #{tpu_custom_call.1} parent=1 // pred_check
      _
    $region23: #{tpu_custom_call.1} parent=1 // pred_check_branch
      %63 = sbr.rel (0) target = $region25
    $region24: #{tpu_custom_call.1} parent=1 // pred_region
      %s65 = ssub.s32 2048, 2048
      %66 = vsyncadd [#allocation9], %s65
      %s67 = sshll.u32 [#allocation10], 4
      %s68 = int_to_ptr.vmem [resolvable:$true] %s67
      %73 = dma.hbm_to_vmem [thread:$0]  %s5, 2048, %s68, [#allocation9], 64, 64, 4
    $region25: #{tpu_custom_call.1} parent=1 // pred_fallthru
      _
    // Predicated region
    $region26: #{tpu_custom_call.1} parent=1 // pred_check
      _
    $region27: #{tpu_custom_call.1} parent=1 // pred_check_branch
      %75 = sbr.rel (0) target = $region29
    $region28: #{tpu_custom_call.1} parent=1 // pred_region
      _
    $region29: #{tpu_custom_call.1} parent=1 // pred_fallthru
      _
    // Predicated region
    $region30: #{tpu_custom_call.1} parent=1 // pred_check
      _
    $region31: #{tpu_custom_call.1} parent=1 // pred_check_branch
      %77 = sbr.rel (0) target = $region33
    $region32: #{tpu_custom_call.1} parent=1 // pred_region
      %78 = dma.done [#allocation3], 64
    $region33: #{tpu_custom_call.1} parent=1 // pred_fallthru
      _
    // Predicated region
    $region34: #{tpu_custom_call.1} parent=1 // pred_check
      _
    $region35: #{tpu_custom_call.1} parent=1 // pred_check_branch
      %80 = sbr.rel (0) target = $region37
    $region36: #{tpu_custom_call.1} parent=1 // pred_region
      %81 = dma.done [#allocation6], 32
    $region37: #{tpu_custom_call.1} parent=1 // pred_fallthru
      _
    // Predicated region
    $region38: #{tpu_custom_call.1} parent=1 // pred_check
      _
    $region39: #{tpu_custom_call.1} parent=1 // pred_check_branch
      %83 = sbr.rel (0) target = $region41
    $region40: #{tpu_custom_call.1} parent=1 // pred_region
      %84 = dma.done [#allocation6], 4096
    $region41: #{tpu_custom_call.1} parent=1 // pred_fallthru
      _
    // Predicated region
    $region42: #{tpu_custom_call.1} parent=1 // pred_check
      _
    $region43: #{tpu_custom_call.1} parent=1 // pred_check_branch
      %86 = sbr.rel (0) target = $region45
    $region44: #{tpu_custom_call.1} parent=1 // pred_region
      %87 = dma.done [#allocation9], 2048
    $region45: #{tpu_custom_call.1} parent=1 // pred_fallthru
      _
    // Predicated region
    $region46: #{tpu_custom_call.1} parent=1 // pred_check
      _
    $region47: #{tpu_custom_call.1} parent=1 // pred_check_branch
      %89 = sbr.rel (0) target = $region49
    $region48: #{tpu_custom_call.1} parent=1 // pred_region
      %90 = dma.done [#allocation9], 2048
    $region49: #{tpu_custom_call.1} parent=1 // pred_fallthru
      _
    %v92 = vld [vmem:[#allocation2] sm:$0xf]
    %v93 = vld [vmem:[#allocation7] sm:$0xff]
    %v94 = vld [vmem:[#allocation7 + $0x8] sm:$0xff]
    %v95 = vld [vmem:[#allocation7 + $0x10] sm:$0xff]
    %v96 = vld [vmem:[#allocation7 + $0x18] sm:$0xff]
    %v97 = vld [vmem:[#allocation7 + $0x20] sm:$0xff]
    %v98 = vld [vmem:[#allocation7 + $0x28] sm:$0xff]
    %v99 = vld [vmem:[#allocation7 + $0x30] sm:$0xff]
    %v100 = vld [vmem:[#allocation7 + $0x38] sm:$0xff]
    %v101 = vld [vmem:[#allocation7 + $0x40] sm:$0xff]
    %v102 = vld [vmem:[#allocation7 + $0x48] sm:$0xff]
    %v103 = vld [vmem:[#allocation7 + $0x50] sm:$0xff]
    %v104 = vld [vmem:[#allocation7 + $0x58] sm:$0xff]
    %v105 = vld [vmem:[#allocation7 + $0x60] sm:$0xff]
    %v106 = vld [vmem:[#allocation7 + $0x68] sm:$0xff]
    %v107 = vld [vmem:[#allocation7 + $0x70] sm:$0xff]
    %v108 = vld [vmem:[#allocation7 + $0x78] sm:$0xff]
    %v109 = vld [vmem:[#allocation7 + $0x80] sm:$0xff]
    %v110 = vld [vmem:[#allocation7 + $0x88] sm:$0xff]
    %v111 = vld [vmem:[#allocation7 + $0x90] sm:$0xff]
    %v112 = vld [vmem:[#allocation7 + $0x98] sm:$0xff]
    %v113 = vld [vmem:[#allocation7 + $0xa0] sm:$0xff]
    %v114 = vld [vmem:[#allocation7 + $0xa8] sm:$0xff]
    %v115 = vld [vmem:[#allocation7 + $0xb0] sm:$0xff]
    %v116 = vld [vmem:[#allocation7 + $0xb8] sm:$0xff]
    %v117 = vld [vmem:[#allocation7 + $0xc0] sm:$0xff]
    %v118 = vld [vmem:[#allocation7 + $0xc8] sm:$0xff]
    %v119 = vld [vmem:[#allocation7 + $0xd0] sm:$0xff]
    %v120 = vld [vmem:[#allocation7 + $0xd8] sm:$0xff]
    %v121 = vld [vmem:[#allocation7 + $0xe0] sm:$0xff]
    %v122 = vld [vmem:[#allocation7 + $0xe8] sm:$0xff]
    %v123 = vld [vmem:[#allocation7 + $0xf0] sm:$0xff]
    %v124 = vld [vmem:[#allocation7 + $0xf8] sm:$0xff]
    %v125 = vld [vmem:[#allocation5] sm:$0x3]
    %v126 = vld [vmem:[#allocation8] sm:$0xff]
    %v127 = vld [vmem:[#allocation8 + $0x8] sm:$0xff]
    %v128 = vld [vmem:[#allocation8 + $0x10] sm:$0xff]
    %v129 = vld [vmem:[#allocation8 + $0x18] sm:$0xff]
    %v130 = vld [vmem:[#allocation8 + $0x20] sm:$0xff]
    %v131 = vld [vmem:[#allocation8 + $0x28] sm:$0xff]
    %v132 = vld [vmem:[#allocation8 + $0x30] sm:$0xff]
    %v133 = vld [vmem:[#allocation8 + $0x38] sm:$0xff]
    %v134 = vld [vmem:[#allocation8 + $0x40] sm:$0xff]
    %v135 = vld [vmem:[#allocation8 + $0x48] sm:$0xff]
    %v136 = vld [vmem:[#allocation8 + $0x50] sm:$0xff]
    %v137 = vld [vmem:[#allocation8 + $0x58] sm:$0xff]
    %v138 = vld [vmem:[#allocation8 + $0x60] sm:$0xff]
    %v139 = vld [vmem:[#allocation8 + $0x68] sm:$0xff]
    %v140 = vld [vmem:[#allocation8 + $0x70] sm:$0xff]
    %v141 = vld [vmem:[#allocation8 + $0x78] sm:$0xff]
    %v158 = vunpack.c.l.b16 %v126
    %v159 = vunpack.c.h.b16 %v126
    %v160 = vunpack.c.l.b16 %v127
    %v161 = vunpack.c.h.b16 %v127
    %v162 = vunpack.c.l.b16 %v128
    %v163 = vunpack.c.h.b16 %v128
    %v164 = vunpack.c.l.b16 %v129
    %v165 = vunpack.c.h.b16 %v129
    %v166 = vunpack.c.l.b16 %v130
    %v167 = vunpack.c.h.b16 %v130
    %v168 = vunpack.c.l.b16 %v131
    %v169 = vunpack.c.h.b16 %v131
    %v170 = vunpack.c.l.b16 %v132
    %v171 = vunpack.c.h.b16 %v132
    %v172 = vunpack.c.l.b16 %v133
    %v173 = vunpack.c.h.b16 %v133
    %v174 = vunpack.c.l.b16 %v134
    %v175 = vunpack.c.h.b16 %v134
    %v176 = vunpack.c.l.b16 %v135
    %v177 = vunpack.c.h.b16 %v135
    %v178 = vunpack.c.l.b16 %v136
    %v179 = vunpack.c.h.b16 %v136
    %v180 = vunpack.c.l.b16 %v137
    %v181 = vunpack.c.h.b16 %v137
    %v182 = vunpack.c.l.b16 %v138
    %v183 = vunpack.c.h.b16 %v138
    %v184 = vunpack.c.l.b16 %v139
    %v185 = vunpack.c.h.b16 %v139
    %v186 = vunpack.c.l.b16 %v140
    %v187 = vunpack.c.h.b16 %v140
    %v188 = vunpack.c.l.b16 %v141
    %v189 = vunpack.c.h.b16 %v141
    %v190 = vpack.c.b16 %v160, %v158
    %v191 = vpack.c.b16 %v161, %v159
    %v192 = vpack.c.b16 %v164, %v162
    %v193 = vpack.c.b16 %v165, %v163
    %v194 = vpack.c.b16 %v168, %v166
    %v195 = vpack.c.b16 %v169, %v167
    %v196 = vpack.c.b16 %v172, %v170
    %v197 = vpack.c.b16 %v173, %v171
    %v198 = vpack.c.b16 %v176, %v174
    %v199 = vpack.c.b16 %v177, %v175
    %v200 = vpack.c.b16 %v180, %v178
    %v201 = vpack.c.b16 %v181, %v179
    %v202 = vpack.c.b16 %v184, %v182
    %v203 = vpack.c.b16 %v185, %v183
    %v204 = vpack.c.b16 %v188, %v186
    %v205 = vpack.c.b16 %v189, %v187
    %222 = vmatprep.subr.bf16.mxu0 %v205
    %223 = vmatpush1.bf16.msra.mxu0 %v204
    %224 = vmatprep.subr.bf16.mxu0 %v203
    %225 = vmatpush1.bf16.msra.mxu0 %v202
    %226 = vmatprep.subr.bf16.mxu0 %v201
    %227 = vmatpush1.bf16.msra.mxu0 %v200
    %228 = vmatprep.subr.bf16.mxu0 %v199
    %229 = vmatpush1.bf16.msra.mxu0 %v198
    %230 = vmatprep.subr.bf16.mxu0 %v197
    %231 = vmatpush1.bf16.msra.mxu0 %v196
    %232 = vmatprep.subr.bf16.mxu0 %v195
    %233 = vmatpush1.bf16.msra.mxu0 %v194
    %234 = vmatprep.subr.bf16.mxu0 %v193
    %235 = vmatpush1.bf16.msra.mxu0 %v192
    %236 = vmatprep.subr.bf16.mxu0 %v191
    %237 = vmatpush1.bf16.msra.mxu0 %v190
    %238 = vmatprep.subr.bf16.mxu0 0
    %239 = vmatpush2.bf16.msra.mxu0 0
    %240 = vmatprep.subr.bf16.mxu0 0
    %241 = vmatpush2.bf16.msra.mxu0 0
    %242 = vmatprep.subr.bf16.mxu0 0
    %243 = vmatpush2.bf16.msra.mxu0 0
    %244 = vmatprep.subr.bf16.mxu0 0
    %245 = vmatpush2.bf16.msra.mxu0 0
    %246 = vmatprep.subr.bf16.mxu0 0
    %247 = vmatpush2.bf16.msra.mxu0 0
    %248 = vmatprep.subr.bf16.mxu0 0
    %249 = vmatpush2.bf16.msra.mxu0 0
    %250 = vmatprep.subr.bf16.mxu0 0
    %251 = vmatpush2.bf16.msra.mxu0 0
    %252 = vmatprep.subr.bf16.mxu0 0
    %253 = vmatpush2.bf16.msra.mxu0 0
    %254 = vmatprep.mubr.bf16.mxu0 0
    %255 = vmatmul.mubr.bf16.gmra.mxu0 %v125
    %v256 = vpop.f32.mrf.mxu0
    %v257 = vadd.f32 0.0, %v256
    %v258 = vpop.f32.mrf.mxu0
    %v259 = vadd.f32 0.0, %v258
    %v260 = vpop.f32.mrf.mxu0
    %v261 = vpop.f32.mrf.mxu0
    %262 = vdwg.mxu0
    %v265 = vunpack.c.l.s4 1983009808
    %v266 = vunpack.c.0.s8 %v265
    %v267 = vlaneseq
    %v268 = vshrl.u32 %v267, 7
    %v269 = vsub.s32 %v266, %v268
    %v270 = vrot.slane %v92, %v269
    %v271 = vcombine.high %v270, %v270
    %v306 = vunpack.c.l.b16 %v93
    %v307 = vunpack.c.h.b16 %v93
    %v308 = vunpack.c.l.b16 %v94
    %v309 = vunpack.c.h.b16 %v94
    %v310 = vunpack.c.l.b16 %v95
    %v311 = vunpack.c.h.b16 %v95
    %v312 = vunpack.c.l.b16 %v96
    %v313 = vunpack.c.h.b16 %v96
    %v314 = vunpack.c.l.b16 %v97
    %v315 = vunpack.c.h.b16 %v97
    %v316 = vunpack.c.l.b16 %v98
    %v317 = vunpack.c.h.b16 %v98
    %v318 = vunpack.c.l.b16 %v99
    %v319 = vunpack.c.h.b16 %v99
    %v320 = vunpack.c.l.b16 %v100
    %v321 = vunpack.c.h.b16 %v100
    %v322 = vunpack.c.l.b16 %v101
    %v323 = vunpack.c.h.b16 %v101
    %v324 = vunpack.c.l.b16 %v102
    %v325 = vunpack.c.h.b16 %v102
    %v326 = vunpack.c.l.b16 %v103
    %v327 = vunpack.c.h.b16 %v103
    %v328 = vunpack.c.l.b16 %v104
    %v329 = vunpack.c.h.b16 %v104
    %v330 = vunpack.c.l.b16 %v105
    %v331 = vunpack.c.h.b16 %v105
    %v332 = vunpack.c.l.b16 %v106
    %v333 = vunpack.c.h.b16 %v106
    %v334 = vunpack.c.l.b16 %v107
    %v335 = vunpack.c.h.b16 %v107
    %v336 = vunpack.c.l.b16 %v108
    %v337 = vunpack.c.h.b16 %v108
    %v338 = vunpack.c.l.b16 %v109
    %v339 = vunpack.c.h.b16 %v109
    %v340 = vunpack.c.l.b16 %v110
    %v341 = vunpack.c.h.b16 %v110
    %v342 = vunpack.c.l.b16 %v111
    %v343 = vunpack.c.h.b16 %v111
    %v344 = vunpack.c.l.b16 %v112
    %v345 = vunpack.c.h.b16 %v112
    %v346 = vunpack.c.l.b16 %v113
    %v347 = vunpack.c.h.b16 %v113
    %v348 = vunpack.c.l.b16 %v114
    %v349 = vunpack.c.h.b16 %v114
    %v350 = vunpack.c.l.b16 %v115
    %v351 = vunpack.c.h.b16 %v115
    %v352 = vunpack.c.l.b16 %v116
    %v353 = vunpack.c.h.b16 %v116
    %v354 = vunpack.c.l.b16 %v117
    %v355 = vunpack.c.h.b16 %v117
    %v356 = vunpack.c.l.b16 %v118
    %v357 = vunpack.c.h.b16 %v118
    %v358 = vunpack.c.l.b16 %v119
    %v359 = vunpack.c.h.b16 %v119
    %v360 = vunpack.c.l.b16 %v120
    %v361 = vunpack.c.h.b16 %v120
    %v362 = vunpack.c.l.b16 %v121
    %v363 = vunpack.c.h.b16 %v121
    %v364 = vunpack.c.l.b16 %v122
    %v365 = vunpack.c.h.b16 %v122
    %v366 = vunpack.c.l.b16 %v123
    %v367 = vunpack.c.h.b16 %v123
    %v368 = vunpack.c.l.b16 %v124
    %v369 = vunpack.c.h.b16 %v124
    %v370 = vpack.c.b16 %v308, %v306
    %v371 = vpack.c.b16 %v309, %v307
    %v372 = vpack.c.b16 %v312, %v310
    %v373 = vpack.c.b16 %v313, %v311
    %v374 = vpack.c.b16 %v316, %v314
    %v375 = vpack.c.b16 %v317, %v315
    %v376 = vpack.c.b16 %v320, %v318
    %v377 = vpack.c.b16 %v321, %v319
    %v378 = vpack.c.b16 %v324, %v322
    %v379 = vpack.c.b16 %v325, %v323
    %v380 = vpack.c.b16 %v328, %v326
    %v381 = vpack.c.b16 %v329, %v327
    %v382 = vpack.c.b16 %v332, %v330
    %v383 = vpack.c.b16 %v333, %v331
    %v384 = vpack.c.b16 %v336, %v334
    %v385 = vpack.c.b16 %v337, %v335
    %v386 = vpack.c.b16 %v340, %v338
    %v387 = vpack.c.b16 %v341, %v339
    %v388 = vpack.c.b16 %v344, %v342
    %v389 = vpack.c.b16 %v345, %v343
    %v390 = vpack.c.b16 %v348, %v346
    %v391 = vpack.c.b16 %v349, %v347
    %v392 = vpack.c.b16 %v352, %v350
    %v393 = vpack.c.b16 %v353, %v351
    %v394 = vpack.c.b16 %v356, %v354
    %v395 = vpack.c.b16 %v357, %v355
    %v396 = vpack.c.b16 %v360, %v358
    %v397 = vpack.c.b16 %v361, %v359
    %v398 = vpack.c.b16 %v364, %v362
    %v399 = vpack.c.b16 %v365, %v363
    %v400 = vpack.c.b16 %v368, %v366
    %v401 = vpack.c.b16 %v369, %v367
    %434 = vmatprep.subr.bf16.mxu0 %v385
    %435 = vmatpush1.bf16.msra.mxu0 %v384
    %436 = vmatprep.subr.bf16.mxu0 %v383
    %437 = vmatpush1.bf16.msra.mxu0 %v382
    %438 = vmatprep.subr.bf16.mxu0 %v381
    %439 = vmatpush1.bf16.msra.mxu0 %v380
    %440 = vmatprep.subr.bf16.mxu0 %v379
    %441 = vmatpush1.bf16.msra.mxu0 %v378
    %442 = vmatprep.subr.bf16.mxu0 %v377
    %443 = vmatpush1.bf16.msra.mxu0 %v376
    %444 = vmatprep.subr.bf16.mxu0 %v375
    %445 = vmatpush1.bf16.msra.mxu0 %v374
    %446 = vmatprep.subr.bf16.mxu0 %v373
    %447 = vmatpush1.bf16.msra.mxu0 %v372
    %448 = vmatprep.subr.bf16.mxu0 %v371
    %449 = vmatpush1.bf16.msra.mxu0 %v370
    %450 = vmatprep.subr.bf16.mxu0 %v401
    %451 = vmatpush2.bf16.msra.mxu0 %v400
    %452 = vmatprep.subr.bf16.mxu0 %v399
    %453 = vmatpush2.bf16.msra.mxu0 %v398
    %454 = vmatprep.subr.bf16.mxu0 %v397
    %455 = vmatpush2.bf16.msra.mxu0 %v396
    %456 = vmatprep.subr.bf16.mxu0 %v395
    %457 = vmatpush2.bf16.msra.mxu0 %v394
    %458 = vmatprep.subr.bf16.mxu0 %v393
    %459 = vmatpush2.bf16.msra.mxu0 %v392
    %460 = vmatprep.subr.bf16.mxu0 %v391
    %461 = vmatpush2.bf16.msra.mxu0 %v390
    %462 = vmatprep.subr.bf16.mxu0 %v389
    %463 = vmatpush2.bf16.msra.mxu0 %v388
    %464 = vmatprep.subr.bf16.mxu0 %v387
    %465 = vmatpush2.bf16.msra.mxu0 %v386
    %466 = vmatprep.mubr.bf16.mxu0 %v271
    %467 = vmatmul.mubr.bf16.gmra.mxu0 %v270
    %v468 = vpop.f32.mrf.mxu0
    %v469 = vadd.f32 %v257, %v468
    %v470 = vpop.f32.mrf.mxu0
    %v471 = vadd.f32 %v259, %v470
    %v472 = vpop.f32.mrf.mxu0
    %v473 = vpop.f32.mrf.mxu0
    %474 = vdwg.mxu0
    %v475 = vld [vmem:[%s4] sm:$0x3]
    %v477 = vlaneseq
    %v478 = vshrl.u32 %v477, 7
    %v479 = vsub.s32 0, %v478
    %v480 = vrot.slane %v475, %v479
    %v481 = vlaneseq
    %v482 = vshrl.u32 %v481, 7
    %v483 = vsub.s32 1, %v482
    %v484 = vrot.slane %v475, %v483
    %v487 = vadd.f32 %v469, %v480
    %v488 = vadd.f32 %v471, %v484
    %v489 = vmax.f32 %v487, 0.0
    %v490 = vmax.f32 %v488, 0.0
    %v491 = vand.u32 2147483647, %v487
    %v492 = vand.u32 2147483647, %v488
    %v493 = vsub.f32 0.0, %v491
    %v494 = vsub.f32 0.0, %v492
    %v495 = vmul.f32 %v493, 1.442695
    %v496 = vpow.pop %v495
    %v497 = vmul.f32 %v494, 1.442695
    %v498 = vpow.pop %v497
    %v499 = vadd.f32 %v496, 1.0
    %v500 = vadd.f32 %v498, 1.0
    %v501 = vlog2.pop %v499
    %v502 = vmul.f32 %v501, 0.6931472
    %v503 = vlog2.pop %v500
    %v504 = vmul.f32 %v503, 0.6931472
    %v505 = vadd.f32 %v489, %v502
    %v506 = vadd.f32 %v490, %v504
    %v507 = vsub.f32 %v505, 0.6931472
    %v508 = vsub.f32 %v506, 0.6931472
    %v509 = vpack.c.bf16 %v507, %v507
    %v510 = vpack.c.bf16 %v508, %v508
    %v511 = vld [vmem:[#allocation10] sm:$0xf]
    %v512 = vld [vmem:[#allocation10 + $0x4] sm:$0xf]
    %v513 = vld [vmem:[#allocation10 + $0x8] sm:$0xf]
    %v514 = vld [vmem:[#allocation10 + $0xc] sm:$0xf]
    %v515 = vld [vmem:[#allocation10 + $0x10] sm:$0xf]
    %v516 = vld [vmem:[#allocation10 + $0x14] sm:$0xf]
    %v517 = vld [vmem:[#allocation10 + $0x18] sm:$0xf]
    %v518 = vld [vmem:[#allocation10 + $0x1c] sm:$0xf]
    %v519 = vld [vmem:[#allocation10 + $0x20] sm:$0xf]
    %v520 = vld [vmem:[#allocation10 + $0x24] sm:$0xf]
    %v521 = vld [vmem:[#allocation10 + $0x28] sm:$0xf]
    %v522 = vld [vmem:[#allocation10 + $0x2c] sm:$0xf]
    %v523 = vld [vmem:[#allocation10 + $0x30] sm:$0xf]
    %v524 = vld [vmem:[#allocation10 + $0x34] sm:$0xf]
    %v525 = vld [vmem:[#allocation10 + $0x38] sm:$0xf]
    %v526 = vld [vmem:[#allocation10 + $0x3c] sm:$0xf]
    %v527 = vld [vmem:[#allocation10 + $0x40] sm:$0xf]
    %v528 = vld [vmem:[#allocation10 + $0x44] sm:$0xf]
    %v529 = vld [vmem:[#allocation10 + $0x48] sm:$0xf]
    %v530 = vld [vmem:[#allocation10 + $0x4c] sm:$0xf]
    %v531 = vld [vmem:[#allocation10 + $0x50] sm:$0xf]
    %v532 = vld [vmem:[#allocation10 + $0x54] sm:$0xf]
    %v533 = vld [vmem:[#allocation10 + $0x58] sm:$0xf]
    %v534 = vld [vmem:[#allocation10 + $0x5c] sm:$0xf]
    %v535 = vld [vmem:[#allocation10 + $0x60] sm:$0xf]
    %v536 = vld [vmem:[#allocation10 + $0x64] sm:$0xf]
    %v537 = vld [vmem:[#allocation10 + $0x68] sm:$0xf]
    %v538 = vld [vmem:[#allocation10 + $0x6c] sm:$0xf]
    %v539 = vld [vmem:[#allocation10 + $0x70] sm:$0xf]
    %v540 = vld [vmem:[#allocation10 + $0x74] sm:$0xf]
    %v541 = vld [vmem:[#allocation10 + $0x78] sm:$0xf]
    %v542 = vld [vmem:[#allocation10 + $0x7c] sm:$0xf]
    %v543 = vld [vmem:[%s6] sm:$0x1]
    %v545 = vlaneseq
    %v546 = vshrl.u32 %v545, 7
    %v547 = vsub.s32 0, %v546
    %v548 = vrot.slane %v543, %v547
    %v582 = vunpack.c.l.b16 %v511
    %v583 = vunpack.c.l.b16 %v512
    %v584 = vunpack.c.l.b16 %v513
    %v585 = vunpack.c.l.b16 %v514
    %v586 = vunpack.c.l.b16 %v515
    %v587 = vunpack.c.l.b16 %v516
    %v588 = vunpack.c.l.b16 %v517
    %v589 = vunpack.c.l.b16 %v518
    %v590 = vunpack.c.l.b16 %v519
    %v591 = vunpack.c.l.b16 %v520
    %v592 = vunpack.c.l.b16 %v521
    %v593 = vunpack.c.l.b16 %v522
    %v594 = vunpack.c.l.b16 %v523
    %v595 = vunpack.c.l.b16 %v524
    %v596 = vunpack.c.l.b16 %v525
    %v597 = vunpack.c.l.b16 %v526
    %v598 = vunpack.c.l.b16 %v527
    %v599 = vunpack.c.l.b16 %v528
    %v600 = vunpack.c.l.b16 %v529
    %v601 = vunpack.c.l.b16 %v530
    %v602 = vunpack.c.l.b16 %v531
    %v603 = vunpack.c.l.b16 %v532
    %v604 = vunpack.c.l.b16 %v533
    %v605 = vunpack.c.l.b16 %v534
    %v606 = vunpack.c.l.b16 %v535
    %v607 = vunpack.c.l.b16 %v536
    %v608 = vunpack.c.l.b16 %v537
    %v609 = vunpack.c.l.b16 %v538
    %v610 = vunpack.c.l.b16 %v539
    %v611 = vunpack.c.l.b16 %v540
    %v612 = vunpack.c.l.b16 %v541
    %v613 = vunpack.c.l.b16 %v542
    %v614 = vpack.c.b16 %v583, %v582
    %v615 = vpack.c.b16 %v585, %v584
    %v616 = vpack.c.b16 %v587, %v586
    %v617 = vpack.c.b16 %v589, %v588
    %v618 = vpack.c.b16 %v591, %v590
    %v619 = vpack.c.b16 %v593, %v592
    %v620 = vpack.c.b16 %v595, %v594
    %v621 = vpack.c.b16 %v597, %v596
    %v622 = vpack.c.b16 %v599, %v598
    %v623 = vpack.c.b16 %v601, %v600
    %v624 = vpack.c.b16 %v603, %v602
    %v625 = vpack.c.b16 %v605, %v604
    %v626 = vpack.c.b16 %v607, %v606
    %v627 = vpack.c.b16 %v609, %v608
    %v628 = vpack.c.b16 %v611, %v610
    %v629 = vpack.c.b16 %v613, %v612
    %646 = vmatprep.subr.bf16.mxu0 0
    %647 = vmatpush1.bf16.msra.mxu0 %v621
    %648 = vmatprep.subr.bf16.mxu0 0
    %649 = vmatpush1.bf16.msra.mxu0 %v620
    %650 = vmatprep.subr.bf16.mxu0 0
    %651 = vmatpush1.bf16.msra.mxu0 %v619
    %652 = vmatprep.subr.bf16.mxu0 0
    %653 = vmatpush1.bf16.msra.mxu0 %v618
    %654 = vmatprep.subr.bf16.mxu0 0
    %655 = vmatpush1.bf16.msra.mxu0 %v617
    %656 = vmatprep.subr.bf16.mxu0 0
    %657 = vmatpush1.bf16.msra.mxu0 %v616
    %658 = vmatprep.subr.bf16.mxu0 0
    %659 = vmatpush1.bf16.msra.mxu0 %v615
    %660 = vmatprep.subr.bf16.mxu0 0
    %661 = vmatpush1.bf16.msra.mxu0 %v614
    %662 = vmatprep.subr.bf16.mxu0 0
    %663 = vmatpush2.bf16.msra.mxu0 %v629
    %664 = vmatprep.subr.bf16.mxu0 0
    %665 = vmatpush2.bf16.msra.mxu0 %v628
    %666 = vmatprep.subr.bf16.mxu0 0
    %667 = vmatpush2.bf16.msra.mxu0 %v627
    %668 = vmatprep.subr.bf16.mxu0 0
    %669 = vmatpush2.bf16.msra.mxu0 %v626
    %670 = vmatprep.subr.bf16.mxu0 0
    %671 = vmatpush2.bf16.msra.mxu0 %v625
    %672 = vmatprep.subr.bf16.mxu0 0
    %673 = vmatpush2.bf16.msra.mxu0 %v624
    %674 = vmatprep.subr.bf16.mxu0 0
    %675 = vmatpush2.bf16.msra.mxu0 %v623
    %676 = vmatprep.subr.bf16.mxu0 0
    %677 = vmatpush2.bf16.msra.mxu0 %v622
    %678 = vmatprep.mubr.bf16.mxu0 %v510
    %679 = vmatmul.mubr.bf16.gmra.mxu0 %v509
    %v680 = vpop.f32.mrf.mxu0
    %v681 = vadd.f32 %v548, %v680
    %v682 = vpop.f32.mrf.mxu0
    %v683 = vpop.f32.mrf.mxu0
    %v684 = vpop.f32.mrf.mxu0
    %685 = vdwg.mxu0
    %686 = vst [vmem:[#allocation11] sm:$0xf] %v681
    // Predicated region
    $region50: #{tpu_custom_call.1} parent=1 // pred_check
      _
    $region51: #{tpu_custom_call.1} parent=1 // pred_check_branch
      %688 = sbr.rel (0) target = $region53
    $region52: #{tpu_custom_call.1} parent=1 // pred_region
      %s690 = ssub.s32 64, 64
      %691 = vsyncadd [#allocation4], %s690
      %s693 = sshll.u32 [#allocation11], 4
      %s694 = int_to_ptr.vmem [resolvable:$true] %s693
      %696 = dma.vmem_to_hbm [thread:$0]  %s694, 64, %s7, [#allocation4]
    $region53: #{tpu_custom_call.1} parent=1 // pred_fallthru
      _
    // Predicated region
    $region54: #{tpu_custom_call.1} parent=1 // pred_check
      _
    $region55: #{tpu_custom_call.1} parent=1 // pred_check_branch
      %698 = sbr.rel (0) target = $region57
    $region56: #{tpu_custom_call.1} parent=1 // pred_region
      %699 = dma.done [#allocation4], 64
    $region57: #{tpu_custom_call.1} parent=1 // pred_fallthru
      _
    %700 = vsyncpa [#allocation3], 1
    %701 = vsyncpa [#allocation6], 1
    %702 = vsyncpa [#allocation9], 1
    %703 = vsyncpa [#allocation4], 1

</llo_original>
